<compile_context>
chip_gen: v7x
topology: tpu7x:2x2x1
jax: 0.10.0
libtpu: 0.0.40
codegen_flags: <defaults>
</compile_context>

<pallas_src>
import functools

import jax
import jax.numpy as jnp
from jax.experimental import pallas as pl
from jax.experimental.pallas import tpu as pltpu


def _round_up(x, m):
    return ((x + m - 1) // m) * m


def _hetconv_kernel(w2_ref, x_ref, o_ref, xcol_ref, *, K, C_in, padding, Wp):
    # w2_ref  : (C_out, K*C_in)  fused im2col weights, resident across the grid
    # x_ref   : (1, C_in, Wp)    lane-dense, gutter-padded batch-block slab
    # o_ref   : (1, C_out, Wp)   lane-dense output block (Wp % 128 == 0)
    # xcol_ref: (K*C_in, Wp)     VMEM scratch holding the im2col operand
    #
    # Build the im2col operand: rows [k*C_in, (k+1)*C_in) hold the padded slab
    # shifted by s = k - padding columns, i.e. xcol[k-rows, j] = slab[:, j+s].
    # One whole-slab copy per tap (the lane shift rides on the XLU); the
    # |s|-wide edge strips the shift never writes are zeroed explicitly every
    # step.  Those strips are only read by gutter output columns (discarded by
    # the wrapper), but zeroing them keeps the scratch fully deterministic.
    for k in range(K):                       # static unroll over taps (K small)
        s = k - padding                      # shift in [-padding, +padding]
        r0 = k * C_in
        if s < 0:
            w = -s
            xcol_ref[r0:r0 + C_in, 0:w] = jnp.zeros((C_in, w), xcol_ref.dtype)
            xcol_ref[r0:r0 + C_in, w:Wp] = x_ref[0, :, 0:Wp - w]
        elif s > 0:
            xcol_ref[r0:r0 + C_in, 0:Wp - s] = x_ref[0, :, s:Wp]
            xcol_ref[r0:r0 + C_in, Wp - s:Wp] = jnp.zeros((C_in, s), xcol_ref.dtype)
        else:
            xcol_ref[r0:r0 + C_in, :] = x_ref[0]

    # Single fat MXU matmul: (C_out, K*C_in) @ (K*C_in, Wp) -> (C_out, Wp).
    o_ref[0] = jnp.dot(
        w2_ref[...], xcol_ref[...], preferred_element_type=jnp.float32
    ).astype(o_ref.dtype)


def _build_combined_weight(w_gwc, w_pwc, groups, padding):
    """Expand grouped weight to dense block-diagonal, fold in pointwise, and
    flatten taps onto the contraction axis.

    w_gwc: (C_out, C_in//groups, K)   PyTorch grouped Conv1d weight layout
    w_pwc: (C_out, C_in, 1)           PyTorch 1x1 Conv1d weight layout
    returns: (C_out, K*C_in) with column k*C_in + c = (tap k, input channel c)
    """
    C_out, Cg_in, K = w_gwc.shape
    C_in = Cg_in * groups
    assert C_out % groups == 0, "groups must divide out_channels"
    assert w_pwc.shape == (C_out, C_in, 1), "pwc weight shape mismatch"
    Cg_out = C_out // groups
    w_full = jnp.zeros((C_out, C_in, K), w_gwc.dtype)
    for g in range(groups):
        w_full = w_full.at[
            g * Cg_out:(g + 1) * Cg_out, g * Cg_in:(g + 1) * Cg_in, :
        ].set(w_gwc[g * Cg_out:(g + 1) * Cg_out])
    # pointwise (dense 1x1 conv) = center-tap contribution
    w_full = w_full.at[:, :, padding].add(w_pwc[:, :, 0])
    # (C_out, C_in, K) -> (C_out, K, C_in) -> (C_out, K*C_in)
    return jnp.transpose(w_full, (0, 2, 1)).reshape(C_out, K * C_in)


def hetconv1d(x, w_gwc, w_pwc, *, groups=4, kernel_size=5, padding=2,
              batch_block=None):
    """Pallas implementation of HetConv1d.forward: gwc(x) + pwc(x).

    x: (N, C_in, L) float32  ->  (N, C_out, L) float32
    """
    N, C_in, L = x.shape
    C_out = w_gwc.shape[0]
    K = kernel_size
    assert K - 1 == 2 * padding, "kernel expects 'same' padding (K odd)"
    assert C_in % groups == 0, "groups must divide in_channels"
    assert C_out % groups == 0, "groups must divide out_channels"
    assert w_gwc.shape == (C_out, C_in // groups, K), "gwc weight shape mismatch"

    Lp = L + 2 * padding          # per-element slot width (zero gutters included)
    KC = K * C_in

    # ---- choose batch elements per grid step (lane width per step) ----------
    if batch_block is None:
        NB = max(1, 1024 // Lp)              # aim ~1024 output lanes per step
        NB = min(NB, max(1, N // 2))         # but keep >= 2 steps when possible
    else:
        NB = batch_block
    NB = max(1, min(NB, N))

    def _step_vmem_bytes(nb):
        wp = _round_up(nb * Lp, 128)
        # xcol scratch + double-buffered input + double-buffered output + weights
        return 4 * (KC * wp + 2 * C_in * wp + 2 * C_out * wp + C_out * KC)

    # Keep the per-step footprint well inside the smallest scoped/physical VMEM
    # budget across generations (v7x: 64 MiB physical, 32 MiB scoped default).
    while NB > 1 and _step_vmem_bytes(NB) > 20 * 1024 * 1024:
        NB = max(1, NB // 2)

    num_blocks = pl.cdiv(N, NB)
    N_pad = num_blocks * NB
    Wp = _round_up(NB * Lp, 128)             # lane-dense block width (% 128 == 0)

    # ---- wrapper-side layout: lane-dense slab with per-element zero gutters --
    # (N, C_in, L) -> pad batch & spatial -> (num_blocks, C_in, NB*Lp) -> pad lanes
    xp = jnp.pad(x, ((0, N_pad - N), (0, 0), (padding, padding)))
    xp = xp.reshape(num_blocks, NB, C_in, Lp)
    xp = jnp.transpose(xp, (0, 2, 1, 3)).reshape(num_blocks, C_in, NB * Lp)
    if Wp != NB * Lp:
        xp = jnp.pad(xp, ((0, 0), (0, 0), (0, Wp - NB * Lp)))

    w2 = _build_combined_weight(w_gwc, w_pwc, groups, padding)   # (C_out, K*C_in)

    kernel = functools.partial(
        _hetconv_kernel, K=K, C_in=C_in, padding=padding, Wp=Wp)

    out = pl.pallas_call(
        kernel,
        out_shape=jax.ShapeDtypeStruct((num_blocks, C_out, Wp), x.dtype),
        grid_spec=pltpu.PrefetchScalarGridSpec(
            num_scalar_prefetch=0,
            grid=(num_blocks,),
            in_specs=[
                # fused weights: same full block every step -> stays resident
                pl.BlockSpec((C_out, KC), lambda b: (0, 0)),
                # one lane-dense batch-block slab per grid step (single fat DMA)
                pl.BlockSpec((1, C_in, Wp), lambda b: (b, 0, 0)),
            ],
            out_specs=pl.BlockSpec((1, C_out, Wp), lambda b: (b, 0, 0)),
            scratch_shapes=[pltpu.VMEM((KC, Wp), jnp.float32)],
        ),
        compiler_params=pltpu.CompilerParams(
            dimension_semantics=("parallel",),
            vmem_limit_bytes=32 * 1024 * 1024,
        ),
    )(w2, xp)

    # Recover (N, C_out, L): drop the lane-pad tail, the per-element gutters and
    # the padded batch rows.  (A fused consumer could skip this extra HBM pass.)
    out = out[:, :, :NB * Lp].reshape(num_blocks, C_out, NB, Lp)
    out = out[:, :, :, padding:padding + L]
    out = jnp.transpose(out, (0, 2, 1, 3)).reshape(N_pad, C_out, L)
    return out[:N]


def _reference(x, w_gwc, w_pwc, groups, padding):
    """Pure-JAX reference matching torch.nn.Conv1d semantics (no bias)."""
    dn = ("NCH", "OIH", "NCH")
    gwc = jax.lax.conv_general_dilated(
        x, w_gwc, window_strides=(1,), padding=((padding, padding),),
        dimension_numbers=dn, feature_group_count=groups)
    pwc = jax.lax.conv_general_dilated(
        x, w_pwc, window_strides=(1,), padding=((0, 0),),
        dimension_numbers=dn)
    return gwc + pwc


if __name__ == "__main__":
    # Shapes consistent with HetConv1d(in_channels=8, out_channels=8,
    # kernel_size=5, padding=2, groups=4) applied to x of shape (N, C_in, L).
    N, C_in, C_out, L = 2, 8, 8, 16
    groups, K, padding = 4, 5, 2

    key = jax.random.PRNGKey(0)
    kx, kg, kp = jax.random.split(key, 3)
    x = jax.random.normal(kx, (N, C_in, L), dtype=jnp.float32)
    # Deterministic synthetic parameters (PyTorch weight layouts).
    w_gwc = jax.random.normal(kg, (C_out, C_in // groups, K), dtype=jnp.float32) * 0.1
    w_pwc = jax.random.normal(kp, (C_out, C_in, 1), dtype=jnp.float32) * 0.1

    out = hetconv1d(x, w_gwc, w_pwc, groups=groups, kernel_size=K, padding=padding)
    out = jax.block_until_ready(out)

    ref = _reference(x, w_gwc, w_pwc, groups, padding)
    assert out.shape == (N, C_out, L)
    assert jnp.allclose(out, ref, atol=1e-5, rtol=1e-5), "mismatch vs reference"

    print("KERNEL_OK")
</pallas_src>

<mosaic_0001>
module attributes {stable_mosaic.version = 11 : i64} {
  func.func @_hetconv_kernel(%arg0: i32, %arg1: memref<8x40xf32, #tpu.memory_space<vmem>>, %arg2: memref<1x8x128xf32, #tpu.memory_space<vmem>>, %arg3: memref<1x8x128xf32, #tpu.memory_space<vmem>>, %arg4: memref<40x128xf32, #tpu.memory_space<vmem>>) attributes {dimension_semantics = [#tpu.dimension_semantics<parallel>], iteration_bounds = array<i64: 2>, scalar_prefetch = 0 : i64, scratch_operands = 1 : i64, tpu.core_type = #tpu.core_type<tc>, window_params = [{pipeline_mode = #tpu.pipeline_mode<synchronous>, transform_indices = @transform_0, window_bounds = array<i64: 8, 40>}, {transform_indices = @transform_1, window_bounds = array<i64: 1, 8, 128>}, {transform_indices = @transform_2, window_bounds = array<i64: 1, 8, 128>}]} {
    %cst = arith.constant 0.000000e+00 : f32
    %0 = vector.broadcast %cst : f32 to vector<8x2xf32>
    %c0 = arith.constant 0 : index
    %c0_0 = arith.constant 0 : index
    %1 = vector.load %arg4[%c0, %c0_0] : memref<40x128xf32, #tpu.memory_space<vmem>>, vector<8x2xf32>
    tpu.vector_store %arg4[%c0, %c0_0], %0 {strides = array<i32>} : memref<40x128xf32, #tpu.memory_space<vmem>>, vector<8x2xf32>,
    %c0_1 = arith.constant 0 : index
    %c0_2 = arith.constant 0 : index
    %c0_3 = arith.constant 0 : index
    %2 = vector.load %arg2[%c0_1, %c0_2, %c0_3] : memref<1x8x128xf32, #tpu.memory_space<vmem>>, vector<1x8x126xf32>
    %3 = vector.shape_cast %2 : vector<1x8x126xf32> to vector<8x126xf32>
    %c0_4 = arith.constant 0 : index
    %c2 = arith.constant 2 : index
    %4 = vector.load %arg4[%c0_4, %c2] : memref<40x128xf32, #tpu.memory_space<vmem>>, vector<8x126xf32>
    tpu.vector_store %arg4[%c0_4, %c2], %3 {strides = array<i32>} : memref<40x128xf32, #tpu.memory_space<vmem>>, vector<8x126xf32>,
    %cst_5 = arith.constant 0.000000e+00 : f32
    %5 = vector.broadcast %cst_5 : f32 to vector<8x1xf32>
    %c8 = arith.constant 8 : index
    %c0_6 = arith.constant 0 : index
    %6 = vector.load %arg4[%c8, %c0_6] : memref<40x128xf32, #tpu.memory_space<vmem>>, vector<8x1xf32>
    tpu.vector_store %arg4[%c8, %c0_6], %5 {strides = array<i32>} : memref<40x128xf32, #tpu.memory_space<vmem>>, vector<8x1xf32>,
    %c0_7 = arith.constant 0 : index
    %c0_8 = arith.constant 0 : index
    %c0_9 = arith.constant 0 : index
    %7 = vector.load %arg2[%c0_7, %c0_8, %c0_9] : memref<1x8x128xf32, #tpu.memory_space<vmem>>, vector<1x8x127xf32>
    %8 = vector.shape_cast %7 : vector<1x8x127xf32> to vector<8x127xf32>
    %c8_10 = arith.constant 8 : index
    %c1 = arith.constant 1 : index
    %9 = vector.load %arg4[%c8_10, %c1] : memref<40x128xf32, #tpu.memory_space<vmem>>, vector<8x127xf32>
    tpu.vector_store %arg4[%c8_10, %c1], %8 {strides = array<i32>} : memref<40x128xf32, #tpu.memory_space<vmem>>, vector<8x127xf32>,
    %c0_11 = arith.constant 0 : index
    %c0_12 = arith.constant 0 : index
    %c0_13 = arith.constant 0 : index
    %10 = vector.load %arg2[%c0_11, %c0_12, %c0_13] : memref<1x8x128xf32, #tpu.memory_space<vmem>>, vector<1x8x128xf32>
    %11 = vector.shape_cast %10 : vector<1x8x128xf32> to vector<8x128xf32>
    %c16 = arith.constant 16 : index
    %c0_14 = arith.constant 0 : index
    %12 = vector.load %arg4[%c16, %c0_14] : memref<40x128xf32, #tpu.memory_space<vmem>>, vector<8x128xf32>
    tpu.vector_store %arg4[%c16, %c0_14], %11 {strides = array<i32>} : memref<40x128xf32, #tpu.memory_space<vmem>>, vector<8x128xf32>,
    %c0_15 = arith.constant 0 : index
    %c0_16 = arith.constant 0 : index
    %c1_17 = arith.constant 1 : index
    %13 = vector.load %arg2[%c0_15, %c0_16, %c1_17] : memref<1x8x128xf32, #tpu.memory_space<vmem>>, vector<1x8x127xf32>
    %14 = vector.shape_cast %13 : vector<1x8x127xf32> to vector<8x127xf32>
    %c24 = arith.constant 24 : index
    %c0_18 = arith.constant 0 : index
    %15 = vector.load %arg4[%c24, %c0_18] : memref<40x128xf32, #tpu.memory_space<vmem>>, vector<8x127xf32>
    tpu.vector_store %arg4[%c24, %c0_18], %14 {strides = array<i32>} : memref<40x128xf32, #tpu.memory_space<vmem>>, vector<8x127xf32>,
    %cst_19 = arith.constant 0.000000e+00 : f32
    %16 = vector.broadcast %cst_19 : f32 to vector<8x1xf32>
    %c24_20 = arith.constant 24 : index
    %c127 = arith.constant 127 : index
    %17 = vector.load %arg4[%c24_20, %c127] : memref<40x128xf32, #tpu.memory_space<vmem>>, vector<8x1xf32>
    tpu.vector_store %arg4[%c24_20, %c127], %16 {strides = array<i32>} : memref<40x128xf32, #tpu.memory_space<vmem>>, vector<8x1xf32>,
    %c0_21 = arith.constant 0 : index
    %c0_22 = arith.constant 0 : index
    %c2_23 = arith.constant 2 : index
    %18 = vector.load %arg2[%c0_21, %c0_22, %c2_23] : memref<1x8x128xf32, #tpu.memory_space<vmem>>, vector<1x8x126xf32>
    %19 = vector.shape_cast %18 : vector<1x8x126xf32> to vector<8x126xf32>
    %c32 = arith.constant 32 : index
    %c0_24 = arith.constant 0 : index
    %20 = vector.load %arg4[%c32, %c0_24] : memref<40x128xf32, #tpu.memory_space<vmem>>, vector<8x126xf32>
    tpu.vector_store %arg4[%c32, %c0_24], %19 {strides = array<i32>} : memref<40x128xf32, #tpu.memory_space<vmem>>, vector<8x126xf32>,
    %cst_25 = arith.constant 0.000000e+00 : f32
    %21 = vector.broadcast %cst_25 : f32 to vector<8x2xf32>
    %c32_26 = arith.constant 32 : index
    %c126 = arith.constant 126 : index
    %22 = vector.load %arg4[%c32_26, %c126] : memref<40x128xf32, #tpu.memory_space<vmem>>, vector<8x2xf32>
    tpu.vector_store %arg4[%c32_26, %c126], %21 {strides = array<i32>} : memref<40x128xf32, #tpu.memory_space<vmem>>, vector<8x2xf32>,
    %c0_27 = arith.constant 0 : index
    %c0_28 = arith.constant 0 : index
    %23 = vector.load %arg1[%c0_27, %c0_28] : memref<8x40xf32, #tpu.memory_space<vmem>>, vector<8x40xf32>
    %c0_29 = arith.constant 0 : index
    %c0_30 = arith.constant 0 : index
    %24 = vector.load %arg4[%c0_29, %c0_30] : memref<40x128xf32, #tpu.memory_space<vmem>>, vector<40x128xf32>
    %cst_31 = arith.constant dense<0.000000e+00> : vector<8x128xf32>
    %25 = tpu.matmul %23, %24, %cst_31 {dimension_numbers = #tpu.dot_dimension_numbers<[1], [0], [0], [1], [0, 0, 1, 1], [], []>} : vector<8x40xf32>, vector<40x128xf32>, vector<8x128xf32> -> vector<8x128xf32>
    %c0_32 = arith.constant 0 : index
    %c0_33 = arith.constant 0 : index
    %c0_34 = arith.constant 0 : index
    %26 = vector.load %arg3[%c0_32, %c0_33, %c0_34] : memref<1x8x128xf32, #tpu.memory_space<vmem>>, vector<1x8x128xf32>
    %27 = vector.shape_cast %26 : vector<1x8x128xf32> to vector<8x128xf32>
    %28 = vector.shape_cast %25 : vector<8x128xf32> to vector<1x8x128xf32>
    tpu.vector_store %arg3[%c0_32, %c0_33, %c0_34], %28 {strides = array<i32>} : memref<1x8x128xf32, #tpu.memory_space<vmem>>, vector<1x8x128xf32>,
    return
  }
  func.func @transform_0(%arg0: i32) -> (i32, i32) {
    %c0_i32 = arith.constant 0 : i32
    %c0_i32_0 = arith.constant 0 : i32
    %c0_i32_1 = arith.constant 0 : i32
    return %c0_i32, %c0_i32_0 : i32, i32
  }
  func.func @transform_1(%arg0: i32) -> (i32, i32, i32) {
    %c0_i32 = arith.constant 0 : i32
    %c0_i32_0 = arith.constant 0 : i32
    %c0_i32_1 = arith.constant 0 : i32
    return %arg0, %c0_i32, %c0_i32_0 : i32, i32, i32
  }
  func.func @transform_2(%arg0: i32) -> (i32, i32, i32) {
    %c0_i32 = arith.constant 0 : i32
    %c0_i32_0 = arith.constant 0 : i32
    %c0_i32_1 = arith.constant 0 : i32
    return %arg0, %c0_i32, %c0_i32_0 : i32, i32, i32
  }
}

</mosaic_0001>

<llo_original>
// kernel: tpu_custom_call.1
$region0: #{tpu_custom_call.1}
  #allocation0 [shape = 'u32[]', space=smem, size = 0x4, offset = 0x4, fixed_abs, tag = 'smem constant byte address 0x4 - core index']
  #allocation1 [shape = 'u32[144,128]{1,0:T(1,128)}', space=vmem, size = 0x12000, scoped, tag = 'internal scratch']
  #allocation2 [shape = 'f32[40,128]{1,0:T(8,128)}', space=vmem, size = 0x5000, scoped, tag = 'scratch operand']
  %s0 = inlined_call_operand.hbm [shape: f32[8,40], index: 0, kind: input, shape index: {}]
  %s1 = inlined_call_operand.hbm [shape: f32[2,8,128], index: 1, kind: input, shape index: {}]
  %s2 = inlined_call_operand.hbm [shape: f32[2,8,128], index: 2, kind: output, shape index: {}]
  %s3 = sld [smem:[#allocation0]]
  $region49: #{tpu_custom_call.1} parent=0
    _
  %s5 = ssub.s32 1, %s3
  %s6 = scalar_select 0, %s5, %s3
  $region1: #{tpu_custom_call.1} parent=0
    #allocation3 [shape = 'u8[4096]{0}', space=vmem, size = 0x1000, scoped, tag = 'input window, operand 0, single buffered']
    #allocation4 [shape = 's32[2]{0}', space=sflag, size = 0x8, scoped, tag = 'scoped memory for tpu_custom_call.1']
    #allocation5 [shape = 's32[2]{0}', space=sflag, size = 0x8, scoped, tag = 'scoped memory for tpu_custom_call.1']
    #allocation6 [shape = 'u8[8192]{0}', space=vmem, size = 0x2000, scoped, tag = 'input window, operand 1']
    #allocation7 [shape = 's32[2]{0}', space=sflag, size = 0x8, scoped, tag = 'scoped memory for tpu_custom_call.1']
    #allocation8 [shape = 'u8[8192]{0}', space=vmem, size = 0x2000, scoped, tag = 'output window, operand 0']
    %7 = vsyncpa [#allocation4], 0
    %8 = vsyncpa [#allocation7], 0
    %s9 = scalar_lea.sflag [#allocation7], 1
    %10 = vsyncpa %s9, 0
    %11 = vsyncpa [#allocation5], 0
    %s12 = scalar_lea.sflag [#allocation5], 1
    %13 = vsyncpa %s12, 0
    loop: start=0, step=1, limit=4
    $region2: #{tpu_custom_call.1} parent=1 // loop_pre_header
      _
    $region3: #{tpu_custom_call.1} parent=1 // loop_header
      %s15 = sphi 0, %s19
      %p16 = scmp.ge.s32.totalorder %s15, 4
      %s23 = sphi 0, %s23
      %s25 = sphi 0, %s23
      %s26 = sphi 0, %s25
      %s40 = sphi 0, %s26
      %s46 = sphi 0, %s48
      %s49 = sphi 0, %s46
      %s50 = sphi 0, %s49
      %s66 = sphi 0, %s50
      %s72 = sphi 0, %s74
      %s75 = sphi 0, %s72
      %s76 = sphi 0, %s75
      %s92 = sphi 0, %s76
    $region4: #{tpu_custom_call.1} parent=1 // loop_header_branch
      %18 = sbr.rel (%p16) target = $region8
    $region5: #{tpu_custom_call.1} parent=1 // loop_body
      %s20 = ssub.s32 %s15, 1
      %s21 = ssub.s32 %s15, 2
      %s22 = sadd.s32 %s15, 1
      %s24 = sadd.s32 %s23, 1
      %p27 = scmp.eq.s32.totalorder %s15, 1
      %p28 = scmp.ne.s32.totalorder %s23, %s25
      %p29 = scmp.eq.s32.totalorder %s15, 0
      %p30 = por %p28, %p29
      %p31 = scmp.ne.s32.totalorder %s23, %s25
      %p32 = scmp.eq.s32.totalorder %s20, 1
      %p33 = por %p31, %p32
      %p34 = scmp.ne.s32.totalorder %s25, %s26
      %p35 = scmp.eq.s32.totalorder %s20, 0
      %p36 = por %p34, %p35
      %p37 = scmp.ne.s32.totalorder %s25, %s26
      %p38 = scmp.eq.s32.totalorder %s21, 1
      %p39 = por %p37, %p38
      %p41 = scmp.ne.s32.totalorder %s26, %s40
      %p42 = scmp.eq.s32.totalorder %s21, 0
      %p43 = por %p41, %p42
      %s44 = ssub.s32 %s15, %s22
      %p45 = scmp.eq.s32.totalorder %s44, 0
      %s47 = sadd.s32 %s46, 1
      %s48 = scalar_select %p45, %s46, %s47
      %p51 = pneg %p45
      %p52 = scmp.eq.s32.totalorder %s15, 1
      %p53 = por %p51, %p52
      %p54 = scmp.ne.s32.totalorder %s46, %s49
      %p55 = scmp.eq.s32.totalorder %s15, 0
      %p56 = por %p54, %p55
      %p57 = scmp.ne.s32.totalorder %s46, %s49
      %p58 = scmp.eq.s32.totalorder %s20, 1
      %p59 = por %p57, %p58
      %p60 = scmp.ne.s32.totalorder %s49, %s50
      %p61 = scmp.eq.s32.totalorder %s20, 0
      %p62 = por %p60, %p61
      %p63 = scmp.ne.s32.totalorder %s49, %s50
      %p64 = scmp.eq.s32.totalorder %s21, 1
      %p65 = por %p63, %p64
      %p67 = scmp.ne.s32.totalorder %s50, %s66
      %p68 = scmp.eq.s32.totalorder %s21, 0
      %p69 = por %p67, %p68
      %s70 = ssub.s32 %s15, %s22
      %p71 = scmp.eq.s32.totalorder %s70, 0
      %s73 = sadd.s32 %s72, 1
      %s74 = scalar_select %p71, %s72, %s73
      %p77 = pneg %p71
      %p78 = scmp.eq.s32.totalorder %s15, 1
      %p79 = por %p77, %p78
      %p80 = scmp.ne.s32.totalorder %s72, %s75
      %p81 = scmp.eq.s32.totalorder %s15, 0
      %p82 = por %p80, %p81
      %p83 = scmp.ne.s32.totalorder %s72, %s75
      %p84 = scmp.eq.s32.totalorder %s20, 1
      %p85 = por %p83, %p84
      %p86 = scmp.ne.s32.totalorder %s75, %s76
      %p87 = scmp.eq.s32.totalorder %s20, 0
      %p88 = por %p86, %p87
      %p89 = scmp.ne.s32.totalorder %s75, %s76
      %p90 = scmp.eq.s32.totalorder %s21, 1
      %p91 = por %p89, %p90
      %p93 = scmp.ne.s32.totalorder %s76, %s92
      %p94 = scmp.eq.s32.totalorder %s21, 0
      %p95 = por %p93, %p94
      %p96 = scmp.le.s32.totalorder 1, %s15
      %p97 = scmp.lt.s32.totalorder %s15, 3
      %p98 = pnand %p96, %p97
      %p99 = pneg %p98
      // Predicated region
      $region9: #{tpu_custom_call.1} parent=5 // pred_check
        _
      $region10: #{tpu_custom_call.1} parent=5 // pred_check_branch
        %101 = sbr.rel (%p98) target = $region12
      $region11: #{tpu_custom_call.1} parent=5 // pred_region
        %s102 = ssub.s32 %s15, 1
        // Predicated region
        $region13: #{tpu_custom_call.1} parent=11 // pred_check
          %p103 = pneg %p36
        $region14: #{tpu_custom_call.1} parent=11 // pred_check_branch
          %105 = sbr.rel (%p103) target = $region16
        $region15: #{tpu_custom_call.1} parent=11 // pred_region
          %s107 = ssub.s32 128, 128
          %108 = vsyncadd [#allocation4], %s107
          %s110 = sshll.u32 [#allocation3], 4
          %s111 = int_to_ptr.vmem [resolvable:$true] %s110
          %113 = dma.hbm_to_vmem [thread:$0]  %s0, 128, %s111, [#allocation4]
        $region16: #{tpu_custom_call.1} parent=11 // pred_fallthru
          _
      $region12: #{tpu_custom_call.1} parent=5 // pred_fallthru
        _
      %p114 = scmp.lt.s32.totalorder %s15, 2
      // Predicated region
      $region17: #{tpu_custom_call.1} parent=5 // pred_check
        %p115 = pneg %p114
      $region18: #{tpu_custom_call.1} parent=5 // pred_check_branch
        %117 = sbr.rel (%p115) target = $region20
      $region19: #{tpu_custom_call.1} parent=5 // pred_region
        // Predicated region
        $region21: #{tpu_custom_call.1} parent=19 // pred_check
          %p118 = pneg %p56
        $region22: #{tpu_custom_call.1} parent=19 // pred_check_branch
          %120 = sbr.rel (%p118) target = $region24
        $region23: #{tpu_custom_call.1} parent=19 // pred_region
          %s121 = sand.u32 %s46, 1
          %s122 = scalar_lea.sflag [#allocation7], %s121
          %s123 = sand.u32 %s46, 1
          %s124 = smul.addr %s123, 8
          %s125 = scalar_lea.vmem [#allocation6], %s124
          %s127 = ssub.s32 128, 128
          %128 = vsyncadd %s122, %s127
          %s129 = smul.addr %s15, 128
          %s130 = scalar_lea.hbm %s1, %s129
          %s132 = sshll.u32 %s125, 4
          %s133 = int_to_ptr.vmem [resolvable:$true] %s132
          %135 = dma.hbm_to_vmem [thread:$0]  %s130, 128, %s133, %s122
        $region24: #{tpu_custom_call.1} parent=19 // pred_fallthru
          _
      $region20: #{tpu_custom_call.1} parent=5 // pred_fallthru
        _
      %p136 = scmp.le.s32.totalorder 1, %s15
      %p137 = scmp.lt.s32.totalorder %s15, 3
      %p138 = pnand %p136, %p137
      %p139 = pneg %p138
      // Predicated region
      $region25: #{tpu_custom_call.1} parent=5 // pred_check
        _
      $region26: #{tpu_custom_call.1} parent=5 // pred_check_branch
        %141 = sbr.rel (%p138) target = $region28
      $region27: #{tpu_custom_call.1} parent=5 // pred_region
        %s142 = ssub.s32 %s15, 1
        // Predicated region
        $region29: #{tpu_custom_call.1} parent=27 // pred_check
          %p143 = pneg %p36
        $region30: #{tpu_custom_call.1} parent=27 // pred_check_branch
          %145 = sbr.rel (%p143) target = $region32
        $region31: #{tpu_custom_call.1} parent=27 // pred_region
          %146 = dma.done [#allocation4], 128
        $region32: #{tpu_custom_call.1} parent=27 // pred_fallthru
          _
        %s147 = sand.u32 %s49, 1
        %s148 = scalar_lea.sflag [#allocation7], %s147
        %s149 = sand.u32 %s49, 1
        %s150 = smul.addr %s149, 8
        %s151 = scalar_lea.vmem [#allocation6], %s150
        // Predicated region
        $region33: #{tpu_custom_call.1} parent=27 // pred_check
          %p152 = pneg %p62
        $region34: #{tpu_custom_call.1} parent=27 // pred_check_branch
          %154 = sbr.rel (%p152) target = $region36
        $region35: #{tpu_custom_call.1} parent=27 // pred_region
          %155 = dma.done %s148, 128
        $region36: #{tpu_custom_call.1} parent=27 // pred_fallthru
          _
        %p156 = pneg %p36
        %p157 = pneg %p33
        %s158 = sand.u32 %s49, 1
        %s159 = scalar_lea.sflag [#allocation7], %s158
        %s160 = sand.u32 %s49, 1
        %s161 = smul.addr %s160, 8
        %s162 = scalar_lea.vmem [#allocation6], %s161
        %p163 = pneg %p62
        %p164 = pneg %p59
        %p165 = pneg %p88
        %p166 = pneg %p85
        %s167 = sand.u32 %s75, 1
        %s168 = scalar_lea.sflag [#allocation5], %s167
        %s169 = sand.u32 %s75, 1
        %s170 = smul.addr %s169, 8
        %s171 = scalar_lea.vmem [#allocation8], %s170
        %vm172 = vcmask 15360
        %173 = vst.msk [vmem:[#allocation2] sm:$0xff] %vm172, 0.0
        %v174 = vld [vmem:[%s151] sm:$0xff]
        %176 = vrot.lane.b32.xlu0 %v174, 2
        %v177 = vpop.permute.xlu0 %176
        %vm179 = vcmask 1047568
        %180 = vst.msk [vmem:[#allocation2] sm:$0xff] %vm179, %v177
        %vm181 = vcmask 7168
        %182 = vst.msk [vmem:[#allocation2 + $0x8] sm:$0xff] %vm181, 0.0
        %v183 = vld [vmem:[%s151] sm:$0xff]
        %185 = vrot.lane.b32.xlu0 %v183, 1
        %v186 = vpop.permute.xlu0 %185
        %vm188 = vcmask 1047560
        %189 = vst.msk [vmem:[#allocation2 + $0x8] sm:$0xff] %vm188, %v186
        %v190 = vld [vmem:[%s151] sm:$0xff]
        %191 = vst [vmem:[#allocation2 + $0x10] sm:$0xff] %v190
        %v192 = vld [vmem:[%s151] sm:$0xff]
        %194 = vrot.lane.b32.xlu0 %v192, 127
        %v195 = vpop.permute.xlu0 %194
        %vm197 = vcmask 1039360
        %198 = vst.msk [vmem:[#allocation2 + $0x18] sm:$0xff] %vm197, %v195
        %vm199 = vcmask 1048568
        %200 = vst.msk [vmem:[#allocation2 + $0x18] sm:$0xff] %vm199, 0.0
        %v201 = vld [vmem:[%s151] sm:$0xff]
        %203 = vrot.lane.b32.xlu0 %v201, 126
        %v204 = vpop.permute.xlu0 %203
        %vm206 = vcmask 1031168
        %207 = vst.msk [vmem:[#allocation2 + $0x20] sm:$0xff] %vm206, %v204
        %vm208 = vcmask 1048560
        %209 = vst.msk [vmem:[#allocation2 + $0x20] sm:$0xff] %vm208, 0.0
        %v210 = vld [vmem:[#allocation3] sm:$0xff]
        %v211 = vld [vmem:[#allocation2] sm:$0xff]
        %v212 = vld [vmem:[#allocation2 + $0x8] sm:$0xff]
        %v213 = vld [vmem:[#allocation2 + $0x10] sm:$0xff]
        %v214 = vld [vmem:[#allocation2 + $0x18] sm:$0xff]
        %v215 = vld [vmem:[#allocation2 + $0x20] sm:$0xff]
        %vm216 = vcmask 326656
        %v218 = vsel %vm216, %v210, 0
        %220 = vmatprep.subr.mxu0 0.0
        %221 = vmatpush1.msra.mxu0 %v211
        %222 = vmatprep.subr.mxu0 0.0
        %223 = vmatpush1.msra.mxu0 %v212
        %224 = vmatprep.subr.mxu0 0.0
        %225 = vmatpush1.msra.mxu0 %v213
        %226 = vmatprep.subr.mxu0 0.0
        %227 = vmatpush1.msra.mxu0 %v214
        %228 = vmatprep.subr.mxu0 0.0
        %229 = vmatpush1.msra.mxu0 %v215
        %230 = vmatprep.subr.mxu0 0.0
        %231 = vmatpush1.msra.mxu0 0.0
        %232 = vmatprep.subr.mxu0 0.0
        %233 = vmatpush1.msra.mxu0 0.0
        %234 = vmatprep.subr.mxu0 0.0
        %235 = vmatpush1.msra.mxu0 0.0
        %236 = vmatprep.subr.mxu0 0.0
        %237 = vmatpush1.msra.mxu0 0.0
        %238 = vmatprep.subr.mxu0 0.0
        %239 = vmatpush1.msra.mxu0 0.0
        %240 = vmatprep.subr.mxu0 0.0
        %241 = vmatpush1.msra.mxu0 0.0
        %242 = vmatprep.subr.mxu0 0.0
        %243 = vmatpush1.msra.mxu0 0.0
        %244 = vmatprep.subr.mxu0 0.0
        %245 = vmatpush1.msra.mxu0 0.0
        %246 = vmatprep.subr.mxu0 0.0
        %247 = vmatpush1.msra.mxu0 0.0
        %248 = vmatprep.subr.mxu0 0.0
        %249 = vmatpush1.msra.mxu0 0.0
        %250 = vmatprep.subr.mxu0 0.0
        %251 = vmatpush1.msra.mxu0 0.0
        %252 = vmatprep.subr.mxu0 0.0
        %253 = vmatpush1.msra.mxu0 0.0
        %254 = vmatprep.subr.mxu0 0.0
        %255 = vmatpush1.msra.mxu0 0.0
        %256 = vmatprep.subr.mxu0 0.0
        %257 = vmatpush1.msra.mxu0 0.0
        %258 = vmatprep.subr.mxu0 0.0
        %259 = vmatpush1.msra.mxu0 0.0
        %260 = vmatprep.subr.mxu0 0.0
        %261 = vmatpush1.msra.mxu0 0.0
        %262 = vmatprep.subr.mxu0 0.0
        %263 = vmatpush1.msra.mxu0 0.0
        %264 = vmatprep.subr.mxu0 0.0
        %265 = vmatpush1.msra.mxu0 0.0
        %266 = vmatprep.subr.mxu0 0.0
        %267 = vmatpush1.msra.mxu0 0.0
        %268 = vmatprep.subr.mxu0 0.0
        %269 = vmatpush1.msra.mxu0 0.0
        %270 = vmatprep.subr.mxu0 0.0
        %271 = vmatpush1.msra.mxu0 0.0
        %272 = vmatprep.subr.mxu0 0.0
        %273 = vmatpush1.msra.mxu0 0.0
        %274 = vmatprep.subr.mxu0 0.0
        %275 = vmatpush1.msra.mxu0 0.0
        %276 = vmatprep.subr.mxu0 0.0
        %277 = vmatpush1.msra.mxu0 0.0
        %278 = vmatprep.subr.mxu0 0.0
        %279 = vmatpush1.msra.mxu0 0.0
        %280 = vmatprep.subr.mxu0 0.0
        %281 = vmatpush1.msra.mxu0 0.0
        %282 = vmatprep.subr.mxu0 0.0
        %283 = vmatpush1.msra.mxu0 0.0
        %284 = vmatprep.mubr.f32.mxu0 0.0
        %285 = vmatmul.mubr.f32.gmra.mrb[0].mxu0 %v218
        %v286 = vpop.f32.mrb[0].mxu0
        %v287 = vadd.f32 0.0, %v286
        %v288 = vpop.f32.mrb[0].mxu0
        %289 = vdwg.mxu0
        %290 = vst [vmem:[%s171] sm:$0xff] %v287
        %s291 = sand.u32 %s75, 1
        %s292 = scalar_lea.sflag [#allocation5], %s291
        %s293 = sand.u32 %s75, 1
        %s294 = smul.addr %s293, 8
        %s295 = scalar_lea.vmem [#allocation8], %s294
        // Predicated region
        $region37: #{tpu_custom_call.1} parent=27 // pred_check
          %p296 = pneg %p85
        $region38: #{tpu_custom_call.1} parent=27 // pred_check_branch
          %298 = sbr.rel (%p296) target = $region40
        $region39: #{tpu_custom_call.1} parent=27 // pred_region
          %s300 = ssub.s32 128, 128
          %301 = vsyncadd %s292, %s300
          %s302 = smul.addr %s20, 128
          %s303 = scalar_lea.hbm %s2, %s302
          %s305 = sshll.u32 %s295, 4
          %s306 = int_to_ptr.vmem [resolvable:$true] %s305
          %308 = dma.vmem_to_hbm [thread:$0]  %s306, 128, %s303, %s292
        $region40: #{tpu_custom_call.1} parent=27 // pred_fallthru
          _
      $region28: #{tpu_custom_call.1} parent=5 // pred_fallthru
        _
      %p309 = scmp.le.s32.totalorder 2, %s15
      // Predicated region
      $region41: #{tpu_custom_call.1} parent=5 // pred_check
        %p310 = pneg %p309
      $region42: #{tpu_custom_call.1} parent=5 // pred_check_branch
        %312 = sbr.rel (%p310) target = $region44
      $region43: #{tpu_custom_call.1} parent=5 // pred_region
        %s313 = ssub.s32 %s15, 2
        // Predicated region
        $region45: #{tpu_custom_call.1} parent=43 // pred_check
          %p314 = pneg %p91
        $region46: #{tpu_custom_call.1} parent=43 // pred_check_branch
          %316 = sbr.rel (%p314) target = $region48
        $region47: #{tpu_custom_call.1} parent=43 // pred_region
          %s317 = sand.u32 %s76, 1
          %s318 = scalar_lea.sflag [#allocation5], %s317
          %s319 = sand.u32 %s76, 1
          %s320 = smul.addr %s319, 8
          %s321 = scalar_lea.vmem [#allocation8], %s320
          %322 = dma.done %s318, 128
        $region48: #{tpu_custom_call.1} parent=43 // pred_fallthru
          _
      $region44: #{tpu_custom_call.1} parent=5 // pred_fallthru
        _
    $region6: #{tpu_custom_call.1} parent=1 // loop_footer
      %s19 = sadd.s32 1, %s15
    $region7: #{tpu_custom_call.1} parent=1 // loop_footer_branch
      %14 = sbr.rel target = $region3
    $region8: #{tpu_custom_call.1} parent=1 // loop_exit
      _
    %323 = vsyncpa [#allocation4], 1
    %s324 = scalar_lea.sflag [#allocation4], 1
    %325 = vsyncpa %s324, 1
    %326 = vsyncpa [#allocation7], 1
    %s327 = scalar_lea.sflag [#allocation7], 1
    %328 = vsyncpa %s327, 1
    %329 = vsyncpa [#allocation5], 1
    %s330 = scalar_lea.sflag [#allocation5], 1
    %331 = vsyncpa %s330, 1

</llo_original>
